<compile_context>
chip_gen: v7x
topology: tpu7x:2x2x1
jax: 0.10.0
libtpu: 0.0.40
codegen_flags: <defaults>
</compile_context>

<pallas_src>
import functools

import jax
import jax.numpy as jnp
from jax.experimental import pallas as pl
from jax.experimental.pallas import tpu as pltpu

BN_EPS = 1e-5


def _fc_block_kernel(x_ref, w_ref, scale_ref, shift_ref, o_ref, acc_ref):
    """Fused Linear + folded-BN(eval) + ReLU epilogue.

    Grid = (N/tm, P/tn, K/tk); K (reduction) is the last, 'arbitrary' axis.
      x_ref:     [tm, tk]
      w_ref:     [tk, tn]   (weight pre-transposed to MXU-native [K, P] layout)
      scale_ref: [1, tn]    gamma * rsqrt(var + eps)
      shift_ref: [1, tn]    (bias - mean) * scale + beta
      acc_ref:   [tm, tn]   f32 VMEM accumulator, resident across the K axis.
    """
    k = pl.program_id(2)

    @pl.when(k == 0)
    def _init():
        acc_ref[...] = jnp.zeros_like(acc_ref)

    # MXU-native [tm, tk] @ [tk, tn]; no per-step transpose of the weight tile.
    acc_ref[...] += jnp.dot(x_ref[...], w_ref[...],
                            preferred_element_type=jnp.float32)

    @pl.when(k == pl.num_programs(2) - 1)
    def _finalize():
        y = acc_ref[...] * scale_ref[...] + shift_ref[...]
        # Dropout is identity in eval mode; ReLU closes the epilogue.
        o_ref[...] = jnp.maximum(y, 0.0).astype(o_ref.dtype)


def prepare_fc_block_params(weight, bias, gamma, beta, running_mean, running_var,
                            *, matmul_dtype=jnp.bfloat16):
    """One-time (per-checkpoint) parameter prep, OUT of the per-call path.

    weight: [P, K] (PyTorch nn.Linear layout).
    Returns (w_kp [K, P] in `matmul_dtype`, scale [1, P] f32, shift [1, P] f32).

    bf16 operands halve x/W HBM bytes and are MXU-native on v5e/v6e/v7x;
    accumulation stays f32 inside the kernel.
    # TODO(synk): optional float8 weight path for v7x's fp8 MXU.
    """
    P, K = weight.shape
    w_kp = jnp.asarray(weight).T.astype(matmul_dtype)          # [K, P], MXU-native

    inv_std = jax.lax.rsqrt(running_var.astype(jnp.float32) + BN_EPS)
    scale = (gamma.astype(jnp.float32) * inv_std).reshape(1, P)
    shift = ((bias.astype(jnp.float32) - running_mean.astype(jnp.float32)) *
             scale[0] + beta.astype(jnp.float32)).reshape(1, P)
    return w_kp, scale, shift


def _pick_tile(dim, candidates):
    """Largest candidate that divides `dim` (dims are pre-padded to align)."""
    for c in candidates:
        if c <= dim and dim % c == 0:
            return c
    return dim


def _pad_axis(a, axis, mult):
    pad = (-a.shape[axis]) % mult
    if pad == 0:
        return a
    widths = [(0, 0)] * a.ndim
    widths[axis] = (0, pad)
    return jnp.pad(a, widths)


@functools.partial(jax.jit, static_argnames=("out_dtype",))
def fc_block_forward(x, w_kp, scale, shift, *, out_dtype=None):
    """x: [N, K]; w_kp: [K, P] (prepared); scale/shift: [1, P] f32."""
    N, K = x.shape
    Kw, P = w_kp.shape
    assert Kw == K and scale.shape == (1, P) and shift.shape == (1, P)
    out_dtype = x.dtype if out_dtype is None else out_dtype

    # Match the prepared weight dtype (bf16 by default on all generations).
    x_mm = x.astype(w_kp.dtype) if x.dtype != w_kp.dtype else x

    # Zero-pad ragged dims: N -> mult of 16 (full bf16 sublane packing),
    # K/P -> mult of 128 (lane-dense blocks, no masked partial stores).
    x_mm = _pad_axis(_pad_axis(x_mm, 0, 16), 1, 128)
    w_p = _pad_axis(_pad_axis(w_kp, 0, 128), 1, 128)
    scale_p = _pad_axis(scale, 1, 128)
    shift_p = _pad_axis(shift, 1, 128)
    Np, Kp = x_mm.shape
    Pp = w_p.shape[1]

    in_bytes = jnp.dtype(w_p.dtype).itemsize
    out_bytes = jnp.dtype(out_dtype).itemsize

    # Large MXU-friendly tiles under a conservative double-buffered VMEM budget
    # (fits v7x's 64 MiB physical VMEM and v5e's small default scoped limit).
    tm = _pick_tile(Np, (512, 256, 128, 64, 32, 16))
    tk = _pick_tile(Kp, (512, 256, 128))
    tn = _pick_tile(Pp, (1024, 512, 256, 128))

    def vmem_need(tm_, tn_, tk_):
        return (2 * tm_ * tk_ * in_bytes        # x (double-buffered)
                + 2 * tk_ * tn_ * in_bytes      # W (double-buffered)
                + 2 * tm_ * tn_ * out_bytes     # out (double-buffered)
                + tm_ * tn_ * 4                 # f32 accumulator
                + 4 * tn_ * 4)                  # scale + shift

    budget = 20 * 2**20
    while vmem_need(tm, tn, tk) > budget and tn > 128:
        tn //= 2
    while vmem_need(tm, tn, tk) > budget and tm > 16:
        tm //= 2

    # v7x has 2 TensorCores: ensure a 'parallel' axis has >= 2 blocks even when
    # the batch collapses to a single tm tile (split the output-feature axis).
    while Np // tm == 1 and Pp // tn < 2 and tn >= 256:
        tn //= 2

    grid = (Np // tm, Pp // tn, Kp // tk)

    row_spec = pl.BlockSpec((1, tn), lambda i, j, k: (0, j))
    if grid[2] >= 3:
        # Many K steps at small batch: triple-buffer the weight stream to hide
        # DMA latency spikes (costs one extra (tk, tn) tile of VMEM).
        w_spec = pl.BlockSpec((tk, tn), lambda i, j, k: (k, j),
                              pipeline_mode=pl.Buffered(3))
    else:
        w_spec = pl.BlockSpec((tk, tn), lambda i, j, k: (k, j))

    vmem_limit = int(min(64 * 2**20, max(32 * 2**20, 2 * vmem_need(tm, tn, tk))))

    out_padded = pl.pallas_call(
        _fc_block_kernel,
        out_shape=jax.ShapeDtypeStruct((Np, Pp), out_dtype),
        grid_spec=pltpu.PrefetchScalarGridSpec(
            num_scalar_prefetch=0,
            grid=grid,
            in_specs=[
                pl.BlockSpec((tm, tk), lambda i, j, k: (i, k)),   # x tile
                w_spec,                                           # W tile ([K, P])
                row_spec,                                         # scale
                row_spec,                                         # shift
            ],
            out_specs=pl.BlockSpec((tm, tn), lambda i, j, k: (i, j)),
            scratch_shapes=[pltpu.VMEM((tm, tn), jnp.float32)],
        ),
        compiler_params=pltpu.CompilerParams(
            dimension_semantics=("parallel", "parallel", "arbitrary"),
            vmem_limit_bytes=vmem_limit),
    )(x_mm, w_p, scale_p, shift_p)

    if (Np, Pp) != (N, P):
        out_padded = out_padded[:N, :P]
    return out_padded


def reference_forward(x, weight, bias, gamma, beta, running_mean, running_var):
    y = x @ weight.T + bias
    y = (y - running_mean) / jnp.sqrt(running_var + BN_EPS) * gamma + beta
    return jnp.maximum(y, 0.0)


if __name__ == "__main__":
    # fc_block(inplanes=128, planes=256), batch N=16 (small, tile-aligned).
    N, inplanes, planes = 16, 128, 256

    key = jax.random.PRNGKey(0)
    kx, kw, kb, kg, kbe, km, kv = jax.random.split(key, 7)

    x = jax.random.normal(kx, (N, inplanes), dtype=jnp.float32)

    # Deterministic synthetic parameters (PyTorch shapes: Linear(inplanes, planes),
    # BatchNorm1d(planes)).
    bound = 1.0 / jnp.sqrt(jnp.float32(inplanes))
    weight = jax.random.uniform(kw, (planes, inplanes), jnp.float32, -bound, bound)
    bias = jax.random.uniform(kb, (planes,), jnp.float32, -bound, bound)
    gamma = 1.0 + 0.1 * jax.random.normal(kg, (planes,), jnp.float32)
    beta = 0.1 * jax.random.normal(kbe, (planes,), jnp.float32)
    running_mean = 0.1 * jax.random.normal(km, (planes,), jnp.float32)
    running_var = jnp.abs(1.0 + 0.1 * jax.random.normal(kv, (planes,), jnp.float32))

    ref = reference_forward(x, weight, bias, gamma, beta, running_mean, running_var)

    # f32 operands -> tight numerical check vs reference.
    w_f32, scale_f, shift_f = prepare_fc_block_params(
        weight, bias, gamma, beta, running_mean, running_var,
        matmul_dtype=jnp.float32)
    out_f32 = jax.block_until_ready(fc_block_forward(x, w_f32, scale_f, shift_f))
    assert out_f32.shape == (N, planes)
    assert jnp.allclose(out_f32, ref, atol=1e-4, rtol=1e-4), "f32 mismatch vs reference"

    # Default inference path: bf16 matmul operands (MXU-native on v5e/v6e/v7x),
    # f32 accumulation; weight transposed + cast once, outside the call path.
    w_bf16, scale, shift = prepare_fc_block_params(
        weight, bias, gamma, beta, running_mean, running_var)
    out_bf16 = jax.block_until_ready(fc_block_forward(x, w_bf16, scale, shift))
    assert out_bf16.shape == (N, planes)
    assert jnp.allclose(out_bf16, ref, atol=5e-2, rtol=5e-2), "bf16 mismatch vs reference"

    print("KERNEL_OK")
</pallas_src>

<mosaic_0001>
module attributes {stable_mosaic.version = 11 : i64} {
  func.func @_fc_block_kernel(%arg0: i32, %arg1: i32, %arg2: i32, %arg3: memref<16x128xf32, #tpu.memory_space<vmem>>, %arg4: memref<128x128xf32, #tpu.memory_space<vmem>>, %arg5: memref<1x128xf32, #tpu.memory_space<vmem>>, %arg6: memref<1x128xf32, #tpu.memory_space<vmem>>, %arg7: memref<16x128xf32, #tpu.memory_space<vmem>>, %arg8: memref<16x128xf32, #tpu.memory_space<vmem>>) attributes {dimension_semantics = [#tpu.dimension_semantics<parallel>, #tpu.dimension_semantics<parallel>, #tpu.dimension_semantics<arbitrary>], iteration_bounds = array<i64: 1, 2, 1>, scalar_prefetch = 0 : i64, scratch_operands = 1 : i64, tpu.core_type = #tpu.core_type<tc>, window_params = [{transform_indices = @transform_0, window_bounds = array<i64: 16, 128>}, {transform_indices = @transform_1, window_bounds = array<i64: 128, 128>}, {transform_indices = @transform_2, window_bounds = array<i64: 1, 128>}, {transform_indices = @transform_3, window_bounds = array<i64: 1, 128>}, {transform_indices = @transform_4, window_bounds = array<i64: 16, 128>}]} {
    %c0_i32 = arith.constant 0 : i32
    %0 = arith.cmpi eq, %arg2, %c0_i32 : i32
    %1 = arith.extui %0 : i1 to i32
    %c0_i32_0 = arith.constant 0 : i32
    %2 = arith.cmpi ne, %1, %c0_i32_0 : i32
    scf.if %2 {
      %cst_10 = arith.constant 0.000000e+00 : f32
      %12 = vector.broadcast %cst_10 : f32 to vector<16x128xf32>
      %c0_11 = arith.constant 0 : index
      %c0_12 = arith.constant 0 : index
      %13 = vector.load %arg8[%c0_11, %c0_12] : memref<16x128xf32, #tpu.memory_space<vmem>>, vector<16x128xf32>
      tpu.vector_store %arg8[%c0_11, %c0_12], %12 {strides = array<i32>} : memref<16x128xf32, #tpu.memory_space<vmem>>, vector<16x128xf32>,
    } else {
    }
    %c0 = arith.constant 0 : index
    %c0_1 = arith.constant 0 : index
    %3 = vector.load %arg8[%c0, %c0_1] : memref<16x128xf32, #tpu.memory_space<vmem>>, vector<16x128xf32>
    %c0_2 = arith.constant 0 : index
    %c0_3 = arith.constant 0 : index
    %4 = vector.load %arg3[%c0_2, %c0_3] : memref<16x128xf32, #tpu.memory_space<vmem>>, vector<16x128xf32>
    %c0_4 = arith.constant 0 : index
    %c0_5 = arith.constant 0 : index
    %5 = vector.load %arg4[%c0_4, %c0_5] : memref<128x128xf32, #tpu.memory_space<vmem>>, vector<128x128xf32>
    %cst = arith.constant dense<0.000000e+00> : vector<16x128xf32>
    %6 = tpu.matmul %4, %5, %cst {dimension_numbers = #tpu.dot_dimension_numbers<[1], [0], [0], [1], [0, 0, 1, 1], [], []>} : vector<16x128xf32>, vector<128x128xf32>, vector<16x128xf32> -> vector<16x128xf32>
    %7 = arith.addf %3, %6 : vector<16x128xf32>
    %c0_6 = arith.constant 0 : index
    %c0_7 = arith.constant 0 : index
    %8 = vector.load %arg8[%c0_6, %c0_7] : memref<16x128xf32, #tpu.memory_space<vmem>>, vector<16x128xf32>
    tpu.vector_store %arg8[%c0_6, %c0_7], %7 {strides = array<i32>} : memref<16x128xf32, #tpu.memory_space<vmem>>, vector<16x128xf32>,
    %c0_i32_8 = arith.constant 0 : i32
    %9 = arith.cmpi eq, %arg2, %c0_i32_8 : i32
    %10 = arith.extui %9 : i1 to i32
    %c0_i32_9 = arith.constant 0 : i32
    %11 = arith.cmpi ne, %10, %c0_i32_9 : i32
    scf.if %11 {
      %c0_10 = arith.constant 0 : index
      %c0_11 = arith.constant 0 : index
      %12 = vector.load %arg8[%c0_10, %c0_11] : memref<16x128xf32, #tpu.memory_space<vmem>>, vector<16x128xf32>
      %c0_12 = arith.constant 0 : index
      %c0_13 = arith.constant 0 : index
      %13 = vector.load %arg5[%c0_12, %c0_13] : memref<1x128xf32, #tpu.memory_space<vmem>>, vector<1x128xf32>
      %14 = vector.broadcast %13 : vector<1x128xf32> to vector<16x128xf32>
      %15 = arith.mulf %12, %14 : vector<16x128xf32>
      %c0_14 = arith.constant 0 : index
      %c0_15 = arith.constant 0 : index
      %16 = vector.load %arg6[%c0_14, %c0_15] : memref<1x128xf32, #tpu.memory_space<vmem>>, vector<1x128xf32>
      %17 = vector.broadcast %16 : vector<1x128xf32> to vector<16x128xf32>
      %18 = arith.addf %15, %17 : vector<16x128xf32>
      %cst_16 = arith.constant 0.000000e+00 : f32
      %19 = vector.broadcast %cst_16 : f32 to vector<16x128xf32>
      %20 = arith.maximumf %18, %19 : vector<16x128xf32>
      %c0_17 = arith.constant 0 : index
      %c0_18 = arith.constant 0 : index
      %21 = vector.load %arg7[%c0_17, %c0_18] : memref<16x128xf32, #tpu.memory_space<vmem>>, vector<16x128xf32>
      tpu.vector_store %arg7[%c0_17, %c0_18], %20 {strides = array<i32>} : memref<16x128xf32, #tpu.memory_space<vmem>>, vector<16x128xf32>,
    } else {
    }
    return
  }
  func.func @transform_0(%arg0: i32, %arg1: i32, %arg2: i32) -> (i32, i32) {
    %c0_i32 = arith.constant 0 : i32
    return %arg0, %arg2 : i32, i32
  }
  func.func @transform_1(%arg0: i32, %arg1: i32, %arg2: i32) -> (i32, i32) {
    %c0_i32 = arith.constant 0 : i32
    return %arg2, %arg1 : i32, i32
  }
  func.func @transform_2(%arg0: i32, %arg1: i32, %arg2: i32) -> (i32, i32) {
    %c0_i32 = arith.constant 0 : i32
    %c0_i32_0 = arith.constant 0 : i32
    return %c0_i32, %arg1 : i32, i32
  }
  func.func @transform_3(%arg0: i32, %arg1: i32, %arg2: i32) -> (i32, i32) {
    %c0_i32 = arith.constant 0 : i32
    %c0_i32_0 = arith.constant 0 : i32
    return %c0_i32, %arg1 : i32, i32
  }
  func.func @transform_4(%arg0: i32, %arg1: i32, %arg2: i32) -> (i32, i32) {
    %c0_i32 = arith.constant 0 : i32
    return %arg0, %arg1 : i32, i32
  }
}

</mosaic_0001>

<llo_original>
// kernel: fc_block_forward.1
$region0: #{fc_block_forward.1}
  #allocation0 [shape = 'u32[]', space=smem, size = 0x4, offset = 0x4, fixed_abs, tag = 'smem constant byte address 0x4 - core index']
  #allocation1 [shape = 'u32[144,128]{1,0:T(1,128)}', space=vmem, size = 0x12000, scoped, tag = 'internal scratch']
  #allocation2 [shape = 'f32[16,128]{1,0:T(8,128)}', space=vmem, size = 0x2000, scoped, tag = 'scratch operand']
  %s0 = inlined_call_operand.hbm [shape: f32[16,128], index: 0, kind: input, shape index: {}]
  %s1 = inlined_call_operand.hbm [shape: f32[128,256], index: 1, kind: input, shape index: {}]
  %s2 = inlined_call_operand.vmem [shape: f32[1,256], index: 2, kind: input, shape index: {}]
  %s3 = inlined_call_operand.vmem [shape: f32[1,256], index: 3, kind: input, shape index: {}]
  %s4 = inlined_call_operand.hbm [shape: f32[16,256], index: 4, kind: output, shape index: {}]
  %s5 = sld [smem:[#allocation0]]
  $region65: #{fc_block_forward.1} parent=0
    _
  %s7 = ssub.s32 1, %s5
  %s8 = scalar_select 0, %s7, %s5
  $region1: #{fc_block_forward.1} parent=0
    #allocation3 [shape = 'u8[8192]{0}', space=vmem, size = 0x2000, scoped, tag = 'input window, operand 0, single buffered']
    #allocation4 [shape = 's32[2]{0}', space=sflag, size = 0x8, scoped, tag = 'scoped memory for fc_block_forward.1']
    #allocation5 [shape = 's32[2]{0}', space=sflag, size = 0x8, scoped, tag = 'scoped memory for fc_block_forward.1']
    #allocation6 [shape = 'u8[131072]{0}', space=vmem, size = 0x20000, scoped, tag = 'input window, operand 1']
    #allocation7 [shape = 's32[2]{0}', space=sflag, size = 0x8, scoped, tag = 'scoped memory for fc_block_forward.1']
    #allocation8 [shape = 'u8[16384]{0}', space=vmem, size = 0x4000, scoped, tag = 'output window, operand 0']
    %9 = vsyncpa [#allocation4], 0
    %10 = vsyncpa [#allocation7], 0
    %s11 = scalar_lea.sflag [#allocation7], 1
    %12 = vsyncpa %s11, 0
    %13 = vsyncpa [#allocation5], 0
    %s14 = scalar_lea.sflag [#allocation5], 1
    %15 = vsyncpa %s14, 0
    loop: start=0, step=1, limit=4
    $region2: #{fc_block_forward.1} parent=1 // loop_pre_header
      _
    $region3: #{fc_block_forward.1} parent=1 // loop_header
      %s17 = sphi 0, %s21
      %p18 = scmp.ge.s32.totalorder %s17, 4
      %s24 = sphi 0, %s43
      %s25 = sphi 0, %s39
      %s26 = sphi 0, %s35
      %s27 = sphi 0, %s24
      %s28 = sphi 0, %s25
      %s29 = sphi 0, %s26
      %s30 = sphi 0, %s27
      %s31 = sphi 0, %s28
      %s32 = sphi 0, %s29
      %s48 = sphi 0, %s50
      %s51 = sphi 0, %s48
      %s52 = sphi 0, %s51
      %s68 = sphi 0, %s52
      %s76 = sphi 0, %s78
      %s79 = sphi 0, %s76
      %s80 = sphi 0, %s79
      %s96 = sphi 0, %s80
      %s102 = sphi 0, %s104
      %s105 = sphi 0, %s102
      %s106 = sphi 0, %s105
      %s122 = sphi 0, %s106
      %s128 = sphi 0, %s130
      %s131 = sphi 0, %s128
      %s132 = sphi 0, %s131
      %s148 = sphi 0, %s132
      %s156 = sphi 0, %s158
      %s159 = sphi 0, %s156
      %s160 = sphi 0, %s159
      %s176 = sphi 0, %s160
    $region4: #{fc_block_forward.1} parent=1 // loop_header_branch
      %20 = sbr.rel (%p18) target = $region8
    $region5: #{fc_block_forward.1} parent=1 // loop_body
      %s22 = ssub.s32 %s17, 1
      %s23 = ssub.s32 %s17, 2
      %s33 = sadd.s32 1, %s26
      %p34 = scmp.ge.s32.totalorder %s33, 1
      %s35 = scalar_select %p34, 0, %s33
      %s36 = sadd.s32 1, %s25
      %s37 = scalar_select %p34, %s36, %s25
      %p38 = scmp.ge.s32.totalorder %s37, 2
      %s39 = scalar_select %p38, 0, %s37
      %s40 = sadd.s32 1, %s24
      %s41 = scalar_select %p38, %s40, %s24
      %p42 = scmp.ge.s32.totalorder %s41, 1
      %s43 = scalar_select %p42, 0, %s41
      %s44 = ssub.s32 %s24, %s43
      %s45 = ssub.s32 %s26, %s35
      %s46 = sor.u32 %s44, %s45
      %p47 = scmp.eq.s32.totalorder %s46, 0
      %s49 = sadd.s32 %s48, 1
      %s50 = scalar_select %p47, %s48, %s49
      %p53 = pneg %p47
      %p54 = scmp.eq.s32.totalorder %s17, 1
      %p55 = por %p53, %p54
      %p56 = scmp.ne.s32.totalorder %s48, %s51
      %p57 = scmp.eq.s32.totalorder %s17, 0
      %p58 = por %p56, %p57
      %p59 = scmp.ne.s32.totalorder %s48, %s51
      %p60 = scmp.eq.s32.totalorder %s22, 1
      %p61 = por %p59, %p60
      %p62 = scmp.ne.s32.totalorder %s51, %s52
      %p63 = scmp.eq.s32.totalorder %s22, 0
      %p64 = por %p62, %p63
      %p65 = scmp.ne.s32.totalorder %s51, %s52
      %p66 = scmp.eq.s32.totalorder %s23, 1
      %p67 = por %p65, %p66
      %p69 = scmp.ne.s32.totalorder %s52, %s68
      %p70 = scmp.eq.s32.totalorder %s23, 0
      %p71 = por %p69, %p70
      %s72 = ssub.s32 %s26, %s35
      %s73 = ssub.s32 %s25, %s39
      %s74 = sor.u32 %s72, %s73
      %p75 = scmp.eq.s32.totalorder %s74, 0
      %s77 = sadd.s32 %s76, 1
      %s78 = scalar_select %p75, %s76, %s77
      %p81 = pneg %p75
      %p82 = scmp.eq.s32.totalorder %s17, 1
      %p83 = por %p81, %p82
      %p84 = scmp.ne.s32.totalorder %s76, %s79
      %p85 = scmp.eq.s32.totalorder %s17, 0
      %p86 = por %p84, %p85
      %p87 = scmp.ne.s32.totalorder %s76, %s79
      %p88 = scmp.eq.s32.totalorder %s22, 1
      %p89 = por %p87, %p88
      %p90 = scmp.ne.s32.totalorder %s79, %s80
      %p91 = scmp.eq.s32.totalorder %s22, 0
      %p92 = por %p90, %p91
      %p93 = scmp.ne.s32.totalorder %s79, %s80
      %p94 = scmp.eq.s32.totalorder %s23, 1
      %p95 = por %p93, %p94
      %p97 = scmp.ne.s32.totalorder %s80, %s96
      %p98 = scmp.eq.s32.totalorder %s23, 0
      %p99 = por %p97, %p98
      %s100 = ssub.s32 %s25, %s39
      %p101 = scmp.eq.s32.totalorder %s100, 0
      %s103 = sadd.s32 %s102, 1
      %s104 = scalar_select %p101, %s102, %s103
      %p107 = pneg %p101
      %p108 = scmp.eq.s32.totalorder %s17, 1
      %p109 = por %p107, %p108
      %p110 = scmp.ne.s32.totalorder %s102, %s105
      %p111 = scmp.eq.s32.totalorder %s17, 0
      %p112 = por %p110, %p111
      %p113 = scmp.ne.s32.totalorder %s102, %s105
      %p114 = scmp.eq.s32.totalorder %s22, 1
      %p115 = por %p113, %p114
      %p116 = scmp.ne.s32.totalorder %s105, %s106
      %p117 = scmp.eq.s32.totalorder %s22, 0
      %p118 = por %p116, %p117
      %p119 = scmp.ne.s32.totalorder %s105, %s106
      %p120 = scmp.eq.s32.totalorder %s23, 1
      %p121 = por %p119, %p120
      %p123 = scmp.ne.s32.totalorder %s106, %s122
      %p124 = scmp.eq.s32.totalorder %s23, 0
      %p125 = por %p123, %p124
      %s126 = ssub.s32 %s25, %s39
      %p127 = scmp.eq.s32.totalorder %s126, 0
      %s129 = sadd.s32 %s128, 1
      %s130 = scalar_select %p127, %s128, %s129
      %p133 = pneg %p127
      %p134 = scmp.eq.s32.totalorder %s17, 1
      %p135 = por %p133, %p134
      %p136 = scmp.ne.s32.totalorder %s128, %s131
      %p137 = scmp.eq.s32.totalorder %s17, 0
      %p138 = por %p136, %p137
      %p139 = scmp.ne.s32.totalorder %s128, %s131
      %p140 = scmp.eq.s32.totalorder %s22, 1
      %p141 = por %p139, %p140
      %p142 = scmp.ne.s32.totalorder %s131, %s132
      %p143 = scmp.eq.s32.totalorder %s22, 0
      %p144 = por %p142, %p143
      %p145 = scmp.ne.s32.totalorder %s131, %s132
      %p146 = scmp.eq.s32.totalorder %s23, 1
      %p147 = por %p145, %p146
      %p149 = scmp.ne.s32.totalorder %s132, %s148
      %p150 = scmp.eq.s32.totalorder %s23, 0
      %p151 = por %p149, %p150
      %s152 = ssub.s32 %s24, %s43
      %s153 = ssub.s32 %s25, %s39
      %s154 = sor.u32 %s152, %s153
      %p155 = scmp.eq.s32.totalorder %s154, 0
      %s157 = sadd.s32 %s156, 1
      %s158 = scalar_select %p155, %s156, %s157
      %p161 = pneg %p155
      %p162 = scmp.eq.s32.totalorder %s17, 1
      %p163 = por %p161, %p162
      %p164 = scmp.ne.s32.totalorder %s156, %s159
      %p165 = scmp.eq.s32.totalorder %s17, 0
      %p166 = por %p164, %p165
      %p167 = scmp.ne.s32.totalorder %s156, %s159
      %p168 = scmp.eq.s32.totalorder %s22, 1
      %p169 = por %p167, %p168
      %p170 = scmp.ne.s32.totalorder %s159, %s160
      %p171 = scmp.eq.s32.totalorder %s22, 0
      %p172 = por %p170, %p171
      %p173 = scmp.ne.s32.totalorder %s159, %s160
      %p174 = scmp.eq.s32.totalorder %s23, 1
      %p175 = por %p173, %p174
      %p177 = scmp.ne.s32.totalorder %s160, %s176
      %p178 = scmp.eq.s32.totalorder %s23, 0
      %p179 = por %p177, %p178
      %p180 = scmp.le.s32.totalorder 1, %s17
      %p181 = scmp.lt.s32.totalorder %s17, 3
      %p182 = pnand %p180, %p181
      %p183 = pneg %p182
      // Predicated region
      $region9: #{fc_block_forward.1} parent=5 // pred_check
        _
      $region10: #{fc_block_forward.1} parent=5 // pred_check_branch
        %185 = sbr.rel (%p182) target = $region12
      $region11: #{fc_block_forward.1} parent=5 // pred_region
        %s186 = ssub.s32 %s17, 1
        // Predicated region
        $region13: #{fc_block_forward.1} parent=11 // pred_check
          %p187 = pneg %p64
        $region14: #{fc_block_forward.1} parent=11 // pred_check_branch
          %189 = sbr.rel (%p187) target = $region16
        $region15: #{fc_block_forward.1} parent=11 // pred_region
          %s190 = smul.u32 2, %s27
          %s192 = ssub.s32 256, 256
          %193 = vsyncadd [#allocation4], %s192
          %s194 = sadd.s32 %s29, %s190
          %s195 = smul.addr %s194, 128
          %s196 = scalar_lea.hbm %s0, %s195
          %s197 = sshll.u32 [#allocation3], 4
          %s198 = int_to_ptr.vmem [resolvable:$true] %s197
          %203 = dma.hbm_to_vmem [thread:$0]  %s196, 256, %s198, [#allocation4], 128, 128, 8
        $region16: #{fc_block_forward.1} parent=11 // pred_fallthru
          _
      $region12: #{fc_block_forward.1} parent=5 // pred_fallthru
        _
      %p204 = scmp.lt.s32.totalorder %s17, 2
      // Predicated region
      $region17: #{fc_block_forward.1} parent=5 // pred_check
        %p205 = pneg %p204
      $region18: #{fc_block_forward.1} parent=5 // pred_check_branch
        %207 = sbr.rel (%p205) target = $region20
      $region19: #{fc_block_forward.1} parent=5 // pred_region
        // Predicated region
        $region21: #{fc_block_forward.1} parent=19 // pred_check
          %p208 = pneg %p86
        $region22: #{fc_block_forward.1} parent=19 // pred_check_branch
          %210 = sbr.rel (%p208) target = $region24
        $region23: #{fc_block_forward.1} parent=19 // pred_region
          %s211 = sand.u32 %s76, 1
          %s212 = scalar_lea.sflag [#allocation7], %s211
          %s213 = sand.u32 %s76, 1
          %s214 = smul.addr %s213, 128
          %s215 = scalar_lea.vmem [#allocation6], %s214
          %s216 = smul.u32 16, %s26
          %s218 = ssub.s32 2048, 2048
          %219 = vsyncadd %s212, %s218
          %s220 = smul.addr %s216, 2
          %s221 = sadd.s32 %s25, %s220
          %s222 = smul.addr %s221, 128
          %s223 = scalar_lea.hbm %s1, %s222
          %s224 = sshll.u32 %s215, 4
          %s225 = int_to_ptr.vmem [resolvable:$true] %s224
          %230 = dma.hbm_to_vmem [thread:$0]  %s223, 2048, %s225, %s212, 256, 128, 8
        $region24: #{fc_block_forward.1} parent=19 // pred_fallthru
          _
        // Predicated region
        $region25: #{fc_block_forward.1} parent=19 // pred_check
          %p231 = pneg %p112
        $region26: #{fc_block_forward.1} parent=19 // pred_check_branch
          %233 = sbr.rel (%p231) target = $region28
        $region27: #{fc_block_forward.1} parent=19 // pred_region
          %p234 = scmp.lt.s32.totalorder %s25, 1
          %s235 = scalar_select %p234, %s25, 1
          %s236 = scalar_lea.vmem %s2, %s235
        $region28: #{fc_block_forward.1} parent=19 // pred_fallthru
          _
        // Predicated region
        $region29: #{fc_block_forward.1} parent=19 // pred_check
          %p237 = pneg %p138
        $region30: #{fc_block_forward.1} parent=19 // pred_check_branch
          %239 = sbr.rel (%p237) target = $region32
        $region31: #{fc_block_forward.1} parent=19 // pred_region
          %p240 = scmp.lt.s32.totalorder %s25, 1
          %s241 = scalar_select %p240, %s25, 1
          %s242 = scalar_lea.vmem %s3, %s241
        $region32: #{fc_block_forward.1} parent=19 // pred_fallthru
          _
      $region20: #{fc_block_forward.1} parent=5 // pred_fallthru
        _
      %p243 = scmp.le.s32.totalorder 1, %s17
      %p244 = scmp.lt.s32.totalorder %s17, 3
      %p245 = pnand %p243, %p244
      %p246 = pneg %p245
      // Predicated region
      $region33: #{fc_block_forward.1} parent=5 // pred_check
        _
      $region34: #{fc_block_forward.1} parent=5 // pred_check_branch
        %248 = sbr.rel (%p245) target = $region36
      $region35: #{fc_block_forward.1} parent=5 // pred_region
        %s249 = ssub.s32 %s17, 1
        // Predicated region
        $region37: #{fc_block_forward.1} parent=35 // pred_check
          %p250 = pneg %p64
        $region38: #{fc_block_forward.1} parent=35 // pred_check_branch
          %252 = sbr.rel (%p250) target = $region40
        $region39: #{fc_block_forward.1} parent=35 // pred_region
          %253 = dma.done [#allocation4], 256
        $region40: #{fc_block_forward.1} parent=35 // pred_fallthru
          _
        %s254 = sand.u32 %s79, 1
        %s255 = scalar_lea.sflag [#allocation7], %s254
        %s256 = sand.u32 %s79, 1
        %s257 = smul.addr %s256, 128
        %s258 = scalar_lea.vmem [#allocation6], %s257
        // Predicated region
        $region41: #{fc_block_forward.1} parent=35 // pred_check
          %p259 = pneg %p92
        $region42: #{fc_block_forward.1} parent=35 // pred_check_branch
          %261 = sbr.rel (%p259) target = $region44
        $region43: #{fc_block_forward.1} parent=35 // pred_region
          %262 = dma.done %s255, 2048
        $region44: #{fc_block_forward.1} parent=35 // pred_fallthru
          _
        %p263 = pneg %p64
        %p264 = pneg %p61
        %s265 = sand.u32 %s79, 1
        %s266 = scalar_lea.sflag [#allocation7], %s265
        %s267 = sand.u32 %s79, 1
        %s268 = smul.addr %s267, 128
        %s269 = scalar_lea.vmem [#allocation6], %s268
        %p270 = pneg %p92
        %p271 = pneg %p89
        %p272 = scmp.lt.s32.totalorder %s28, 1
        %s273 = scalar_select %p272, %s28, 1
        %s274 = scalar_lea.vmem %s2, %s273
        %p275 = pneg %p118
        %p276 = pneg %p115
        %p277 = scmp.lt.s32.totalorder %s28, 1
        %s278 = scalar_select %p277, %s28, 1
        %s279 = scalar_lea.vmem %s3, %s278
        %p280 = pneg %p144
        %p281 = pneg %p141
        %p282 = pneg %p172
        %p283 = pneg %p169
        %s284 = sand.u32 %s159, 1
        %s285 = scalar_lea.sflag [#allocation5], %s284
        %s286 = sand.u32 %s159, 1
        %s287 = smul.addr %s286, 16
        %s288 = scalar_lea.vmem [#allocation8], %s287
        %s289 = smul.u32 2, %s27
        %s290 = smul.u32 16, %s29
        %p291 = scmp.lt.s32.totalorder %s28, 1
        %s292 = scalar_select %p291, %s28, 1
        %s293 = scalar_lea.vmem %s2, %s292
        %p294 = scmp.lt.s32.totalorder %s28, 1
        %s295 = scalar_select %p294, %s28, 1
        %s296 = scalar_lea.vmem %s3, %s295
        %s297 = smul.u32 2, %s27
        %p298 = scmp.eq.s32.totalorder %s29, 0
        // Predicated region
        $region45: #{fc_block_forward.1} parent=35 // pred_check
          %p299 = pneg %p298
        $region46: #{fc_block_forward.1} parent=35 // pred_check_branch
          %301 = sbr.rel (%p299) target = $region48
        $region47: #{fc_block_forward.1} parent=35 // pred_region
          %302 = vst [vmem:[#allocation2] sm:$0xff] 0.0
          %303 = vst [vmem:[#allocation2 + $0x8] sm:$0xff] 0.0
        $region48: #{fc_block_forward.1} parent=35 // pred_fallthru
          _
        %v304 = vld [vmem:[#allocation2] sm:$0xff]
        %v305 = vld [vmem:[#allocation2 + $0x8] sm:$0xff]
        %v306 = vld [vmem:[#allocation3] sm:$0xff]
        %v307 = vld [vmem:[#allocation3 + $0x8] sm:$0xff]
        %v308 = vld [vmem:[%s258] sm:$0xff]
        %v309 = vld [vmem:[%s258 + $0x8] sm:$0xff]
        %v310 = vld [vmem:[%s258 + $0x10] sm:$0xff]
        %v311 = vld [vmem:[%s258 + $0x18] sm:$0xff]
        %v312 = vld [vmem:[%s258 + $0x20] sm:$0xff]
        %v313 = vld [vmem:[%s258 + $0x28] sm:$0xff]
        %v314 = vld [vmem:[%s258 + $0x30] sm:$0xff]
        %v315 = vld [vmem:[%s258 + $0x38] sm:$0xff]
        %v316 = vld [vmem:[%s258 + $0x40] sm:$0xff]
        %v317 = vld [vmem:[%s258 + $0x48] sm:$0xff]
        %v318 = vld [vmem:[%s258 + $0x50] sm:$0xff]
        %v319 = vld [vmem:[%s258 + $0x58] sm:$0xff]
        %v320 = vld [vmem:[%s258 + $0x60] sm:$0xff]
        %v321 = vld [vmem:[%s258 + $0x68] sm:$0xff]
        %v322 = vld [vmem:[%s258 + $0x70] sm:$0xff]
        %v323 = vld [vmem:[%s258 + $0x78] sm:$0xff]
        %324 = vmatprep.subr.mxu0 0.0
        %325 = vmatpush1.msra.mxu0 %v308
        %326 = vmatprep.subr.mxu0 0.0
        %327 = vmatpush1.msra.mxu0 %v309
        %328 = vmatprep.subr.mxu0 0.0
        %329 = vmatpush1.msra.mxu0 %v310
        %330 = vmatprep.subr.mxu0 0.0
        %331 = vmatpush1.msra.mxu0 %v311
        %332 = vmatprep.subr.mxu0 0.0
        %333 = vmatpush1.msra.mxu0 %v312
        %334 = vmatprep.subr.mxu0 0.0
        %335 = vmatpush1.msra.mxu0 %v313
        %336 = vmatprep.subr.mxu0 0.0
        %337 = vmatpush1.msra.mxu0 %v314
        %338 = vmatprep.subr.mxu0 0.0
        %339 = vmatpush1.msra.mxu0 %v315
        %340 = vmatprep.subr.mxu0 0.0
        %341 = vmatpush1.msra.mxu0 %v316
        %342 = vmatprep.subr.mxu0 0.0
        %343 = vmatpush1.msra.mxu0 %v317
        %344 = vmatprep.subr.mxu0 0.0
        %345 = vmatpush1.msra.mxu0 %v318
        %346 = vmatprep.subr.mxu0 0.0
        %347 = vmatpush1.msra.mxu0 %v319
        %348 = vmatprep.subr.mxu0 0.0
        %349 = vmatpush1.msra.mxu0 %v320
        %350 = vmatprep.subr.mxu0 0.0
        %351 = vmatpush1.msra.mxu0 %v321
        %352 = vmatprep.subr.mxu0 0.0
        %353 = vmatpush1.msra.mxu0 %v322
        %354 = vmatprep.subr.mxu0 0.0
        %355 = vmatpush1.msra.mxu0 %v323
        %356 = vmatprep.subr.mxu0 0.0
        %357 = vmatpush1.msra.mxu0 0.0
        %358 = vmatprep.subr.mxu0 0.0
        %359 = vmatpush1.msra.mxu0 0.0
        %360 = vmatprep.subr.mxu0 0.0
        %361 = vmatpush1.msra.mxu0 0.0
        %362 = vmatprep.subr.mxu0 0.0
        %363 = vmatpush1.msra.mxu0 0.0
        %364 = vmatprep.subr.mxu0 0.0
        %365 = vmatpush1.msra.mxu0 0.0
        %366 = vmatprep.subr.mxu0 0.0
        %367 = vmatpush1.msra.mxu0 0.0
        %368 = vmatprep.subr.mxu0 0.0
        %369 = vmatpush1.msra.mxu0 0.0
        %370 = vmatprep.subr.mxu0 0.0
        %371 = vmatpush1.msra.mxu0 0.0
        %372 = vmatprep.subr.mxu0 0.0
        %373 = vmatpush1.msra.mxu0 0.0
        %374 = vmatprep.subr.mxu0 0.0
        %375 = vmatpush1.msra.mxu0 0.0
        %376 = vmatprep.subr.mxu0 0.0
        %377 = vmatpush1.msra.mxu0 0.0
        %378 = vmatprep.subr.mxu0 0.0
        %379 = vmatpush1.msra.mxu0 0.0
        %380 = vmatprep.subr.mxu0 0.0
        %381 = vmatpush1.msra.mxu0 0.0
        %382 = vmatprep.subr.mxu0 0.0
        %383 = vmatpush1.msra.mxu0 0.0
        %384 = vmatprep.subr.mxu0 0.0
        %385 = vmatpush1.msra.mxu0 0.0
        %386 = vmatprep.subr.mxu0 0.0
        %387 = vmatpush1.msra.mxu0 0.0
        %388 = vmatprep.mubr.f32.mxu0 0.0
        %389 = vmatmul.mubr.f32.gmra.mrb[0].mxu0 %v306
        %v390 = vpop.f32.mrb[0].mxu0
        %v391 = vadd.f32 0.0, %v390
        %v392 = vpop.f32.mrb[0].mxu0
        %393 = vmatprep.mubr.f32.mxu0 0.0
        %394 = vmatmul.mubr.f32.gmra.mrb[0].mxu0 %v307
        %v395 = vpop.f32.mrb[0].mxu0
        %v396 = vadd.f32 0.0, %v395
        %v397 = vpop.f32.mrb[0].mxu0
        %398 = vdwg.mxu0
        %v399 = vadd.f32 %v304, %v391
        %v400 = vadd.f32 %v305, %v396
        %401 = vst [vmem:[#allocation2] sm:$0xff] %v399
        %402 = vst [vmem:[#allocation2 + $0x8] sm:$0xff] %v400
        // Predicated region
        $region49: #{fc_block_forward.1} parent=35 // pred_check
          %p403 = pneg %p298
        $region50: #{fc_block_forward.1} parent=35 // pred_check_branch
          %405 = sbr.rel (%p403) target = $region52
        $region51: #{fc_block_forward.1} parent=35 // pred_region
          %v406 = vld [vmem:[#allocation2] sm:$0xff]
          %v407 = vld [vmem:[#allocation2 + $0x8] sm:$0xff]
          %v408 = vld [vmem:[%s293] sm:$0x1]
          %v410 = vlaneseq
          %v411 = vshrl.u32 %v410, 7
          %v412 = vsub.s32 0, %v411
          %v413 = vrot.slane %v408, %v412
          %v415 = vmul.f32 %v406, %v413
          %v416 = vmul.f32 %v407, %v413
          %v417 = vld [vmem:[%s296] sm:$0x1]
          %v419 = vlaneseq
          %v420 = vshrl.u32 %v419, 7
          %v421 = vsub.s32 0, %v420
          %v422 = vrot.slane %v417, %v421
          %v424 = vadd.f32 %v415, %v422
          %v425 = vadd.f32 %v416, %v422
          %v426 = vmax.f32 %v424, 0.0
          %v427 = vmax.f32 %v425, 0.0
          %428 = vst [vmem:[%s288] sm:$0xff] %v426
          %429 = vst [vmem:[%s288 + $0x8] sm:$0xff] %v427
        $region52: #{fc_block_forward.1} parent=35 // pred_fallthru
          _
        %s430 = sand.u32 %s159, 1
        %s431 = scalar_lea.sflag [#allocation5], %s430
        %s432 = sand.u32 %s159, 1
        %s433 = smul.addr %s432, 16
        %s434 = scalar_lea.vmem [#allocation8], %s433
        // Predicated region
        $region53: #{fc_block_forward.1} parent=35 // pred_check
          %p435 = pneg %p169
        $region54: #{fc_block_forward.1} parent=35 // pred_check_branch
          %437 = sbr.rel (%p435) target = $region56
        $region55: #{fc_block_forward.1} parent=35 // pred_region
          %s438 = smul.u32 2, %s27
          %s440 = ssub.s32 256, 256
          %441 = vsyncadd %s431, %s440
          %s442 = smul.addr %s438, 2
          %s443 = sadd.s32 %s28, %s442
          %s444 = smul.addr %s443, 128
          %s445 = scalar_lea.hbm %s4, %s444
          %s446 = sshll.u32 %s434, 4
          %s447 = int_to_ptr.vmem [resolvable:$true] %s446
          %452 = dma.vmem_to_hbm [thread:$0]  %s447, 256, %s445, %s431, 128, 256, 8
        $region56: #{fc_block_forward.1} parent=35 // pred_fallthru
          _
      $region36: #{fc_block_forward.1} parent=5 // pred_fallthru
        _
      %p453 = scmp.le.s32.totalorder 2, %s17
      // Predicated region
      $region57: #{fc_block_forward.1} parent=5 // pred_check
        %p454 = pneg %p453
      $region58: #{fc_block_forward.1} parent=5 // pred_check_branch
        %456 = sbr.rel (%p454) target = $region60
      $region59: #{fc_block_forward.1} parent=5 // pred_region
        %s457 = ssub.s32 %s17, 2
        // Predicated region
        $region61: #{fc_block_forward.1} parent=59 // pred_check
          %p458 = pneg %p175
        $region62: #{fc_block_forward.1} parent=59 // pred_check_branch
          %460 = sbr.rel (%p458) target = $region64
        $region63: #{fc_block_forward.1} parent=59 // pred_region
          %s461 = sand.u32 %s160, 1
          %s462 = scalar_lea.sflag [#allocation5], %s461
          %s463 = sand.u32 %s160, 1
          %s464 = smul.addr %s463, 16
          %s465 = scalar_lea.vmem [#allocation8], %s464
          %466 = dma.done %s462, 256
        $region64: #{fc_block_forward.1} parent=59 // pred_fallthru
          _
      $region60: #{fc_block_forward.1} parent=5 // pred_fallthru
        _
    $region6: #{fc_block_forward.1} parent=1 // loop_footer
      %s21 = sadd.s32 1, %s17
    $region7: #{fc_block_forward.1} parent=1 // loop_footer_branch
      %16 = sbr.rel target = $region3
    $region8: #{fc_block_forward.1} parent=1 // loop_exit
      _
    %467 = vsyncpa [#allocation4], 1
    %s468 = scalar_lea.sflag [#allocation4], 1
    %469 = vsyncpa %s468, 1
    %470 = vsyncpa [#allocation7], 1
    %s471 = scalar_lea.sflag [#allocation7], 1
    %472 = vsyncpa %s471, 1
    %473 = vsyncpa [#allocation5], 1
    %s474 = scalar_lea.sflag [#allocation5], 1
    %475 = vsyncpa %s474, 1

</llo_original>
